<compile_context>
chip_gen: v5e
topology: v5e:2x2
jax: 0.10.0
libtpu: 0.0.40
codegen_flags: <defaults>
</compile_context>

<pallas_src>
import functools

import jax
import jax.numpy as jnp
from jax.experimental import pallas as pl
from jax.experimental.pallas import tpu as pltpu


def gnn_kernel(x_ref, w1_ref, b1_ref, w2_ref, b2_ref, w3_ref, b3_ref, o_ref,
               *, n_graphs, n_in, a_coef, c_coef):
    """Single invocation over the whole (flattened, node-major) batch.

    x_ref : (N*B, Fin)   row j*B + b  ==  node j of graph b
    o_ref : (N*B, 128)   lane-padded output of the Linear head
    """

    def ring_aggregate(z):
        # z_prev[j*B + b] = z[((j-1) mod N)*B + b]: one sublane rotate by B on
        # the node-major flat slab (XLU slot; wrap-around handled for free).
        z_prev = pltpu.roll(z, shift=n_graphs, axis=0)
        return a_coef * z_prev + c_coef * z

    x = x_ref[...]                                     # (N*B, Fin)
    w1 = w1_ref[...]                                   # (Fin, H)

    # --- GCNConv(Fin=3 -> 64): K is tiny, keep it off the MXU (VPU only). ----
    z1 = x[:, 0:1] * w1[0:1, :]
    for k in range(1, n_in):
        z1 = z1 + x[:, k:k + 1] * w1[k:k + 1, :]       # (N*B, H)
    h1 = jnp.maximum(ring_aggregate(z1) + b1_ref[...], 0.0)

    # --- GCNConv(64 -> 64): one MXU matmul over the full N*B-row slab. -------
    # TODO(synk): at larger N/B cast h1/h2 to bfloat16 for the MXU on v6e/v7x.
    z2 = jnp.dot(h1, w2_ref[...], preferred_element_type=jnp.float32)
    h2 = jnp.maximum(ring_aggregate(z2) + b2_ref[...], 0.0)

    # --- Linear(64 -> 3), zero-padded to 128 lanes for an unmasked store. ----
    out = jnp.dot(h2, w3_ref[...], preferred_element_type=jnp.float32) + b3_ref[...]
    o_ref[...] = out.astype(o_ref.dtype)


@jax.jit
def gnn_force_field_forward(node_features, edge_index, params):
    """node_features: (B, N, 3) float32.  edge_index is accepted but unused,
    exactly as in the PyTorch forward (which overwrites it with a ring graph).
    """
    del edge_index
    w1, b1, w2, b2, w3, b3 = params
    B, N, Fin = node_features.shape
    H = w1.shape[1]
    Fout = w3.shape[1]
    fout_pad = 128                      # lane-dense output store inside the kernel

    # GCN normalization for the B-times-duplicated ring graph (+ self loops):
    # every node degree is B + 1  =>  per-edge weight 1/(B+1), B parallel edges.
    # (Baked in at trace time; changing B re-traces, as expected.)
    a_coef = float(B) / float(B + 1)    # weight on the (j-1) -> j messages
    c_coef = 1.0 / float(B + 1)         # weight on the self loop

    # Node-major flat layout: row j*B + b holds node j of graph b, so the
    # per-graph ring shift becomes a single roll by B (wrap included) and the
    # matmuls see N*B sublane rows instead of N.
    x_flat = jnp.transpose(node_features, (1, 0, 2)).reshape(N * B, Fin)

    # Zero-pad the head so the kernel writes full 128-lane rows (unmasked vst).
    w3_p = jnp.zeros((H, fout_pad), w3.dtype).at[:, :Fout].set(w3)
    b3_p = jnp.zeros((1, fout_pad), b3.dtype).at[:, :Fout].set(b3)

    kernel = functools.partial(gnn_kernel, n_graphs=B, n_in=Fin,
                               a_coef=a_coef, c_coef=c_coef)

    # Advisory cost so XLA schedules the custom call correctly inside the jit.
    flops = 2 * N * B * (Fin * H + H * H + H * fout_pad)
    bytes_accessed = 4 * (x_flat.size + w1.size + b1.size + w2.size + b2.size
                          + w3_p.size + b3_p.size + N * B * fout_pad)

    out_flat = pl.pallas_call(
        kernel,
        out_shape=jax.ShapeDtypeStruct((N * B, fout_pad), jnp.float32),
        # No grid: one step, whole arrays resident in VMEM for the full call.
        in_specs=[pl.BlockSpec(memory_space=pltpu.MemorySpace.VMEM)
                  for _ in range(7)],
        out_specs=pl.BlockSpec(memory_space=pltpu.MemorySpace.VMEM),
        cost_estimate=pl.CostEstimate(flops=flops, transcendentals=0,
                                      bytes_accessed=bytes_accessed),
    )(x_flat, w1, b1, w2, b2, w3_p, b3_p)

    # Undo the layout plumbing (fused by jit around the custom call).
    return out_flat.reshape(N, B, fout_pad)[:, :, :Fout].transpose(1, 0, 2)


def _reference_forward(x, params):
    """Pure-JAX reference (same math, no Pallas) used for the in-script check."""
    w1, b1, w2, b2, w3, b3 = params
    B = x.shape[0]
    a = B / (B + 1.0)
    c = 1.0 / (B + 1.0)

    def gcn(z, w, b):
        zl = jnp.einsum("bnf,fh->bnh", z, w)
        return a * jnp.roll(zl, 1, axis=1) + c * zl + b

    h = jax.nn.relu(gcn(x, w1, b1))
    h = jax.nn.relu(gcn(h, w2, b2))
    return jnp.einsum("bnh,ho->bno", h, w3) + b3


def init_params(key, fin=3, hidden=64, fout=3):
    ks = jax.random.split(key, 6)
    s1 = (6.0 / (fin + hidden)) ** 0.5
    s2 = (6.0 / (hidden + hidden)) ** 0.5
    s3 = (6.0 / (hidden + fout)) ** 0.5
    w1 = jax.random.uniform(ks[0], (fin, hidden), jnp.float32, -s1, s1)
    b1 = jax.random.uniform(ks[1], (1, hidden), jnp.float32, -0.1, 0.1)
    w2 = jax.random.uniform(ks[2], (hidden, hidden), jnp.float32, -s2, s2)
    b2 = jax.random.uniform(ks[3], (1, hidden), jnp.float32, -0.1, 0.1)
    w3 = jax.random.uniform(ks[4], (hidden, fout), jnp.float32, -s3, s3)
    b3 = jax.random.uniform(ks[5], (1, fout), jnp.float32, -0.1, 0.1)
    return (w1, b1, w2, b2, w3, b3)


if __name__ == "__main__":
    key = jax.random.PRNGKey(0)
    k_x, k_p = jax.random.split(key)

    B, N, FIN = 2, 16, 3            # 2 graphs, 16 nodes each, 3-d node features
    x = jax.random.normal(k_x, (B, N, FIN), dtype=jnp.float32)
    # edge_index is accepted but unused (the PyTorch forward overwrites it).
    edge_index = jnp.zeros((2, B * N), dtype=jnp.int32)

    params = init_params(k_p)

    out = gnn_force_field_forward(x, edge_index, params)
    out = jax.block_until_ready(out)

    ref = _reference_forward(x, params)
    assert out.shape == (B, N, 3), out.shape
    assert jnp.allclose(out, ref, atol=1e-4, rtol=1e-4), "mismatch vs reference"

    print("KERNEL_OK")
</pallas_src>

<mosaic_0001>
module attributes {stable_mosaic.version = 11 : i64} {
  func.func @gnn_kernel(%arg0: memref<32x3xf32, #tpu.memory_space<vmem>>, %arg1: memref<3x64xf32, #tpu.memory_space<vmem>>, %arg2: memref<1x64xf32, #tpu.memory_space<vmem>>, %arg3: memref<64x64xf32, #tpu.memory_space<vmem>>, %arg4: memref<1x64xf32, #tpu.memory_space<vmem>>, %arg5: memref<64x128xf32, #tpu.memory_space<vmem>>, %arg6: memref<1x128xf32, #tpu.memory_space<vmem>>, %arg7: memref<32x128xf32, #tpu.memory_space<vmem>>) attributes {dimension_semantics = [], scalar_prefetch = 0 : i64, scratch_operands = 0 : i64, tpu.core_type = #tpu.core_type<tc>} {
    %c0 = arith.constant 0 : index
    %c0_0 = arith.constant 0 : index
    %0 = vector.load %arg0[%c0, %c0_0] : memref<32x3xf32, #tpu.memory_space<vmem>>, vector<32x3xf32>
    %c0_1 = arith.constant 0 : index
    %c0_2 = arith.constant 0 : index
    %1 = vector.load %arg1[%c0_1, %c0_2] : memref<3x64xf32, #tpu.memory_space<vmem>>, vector<3x64xf32>
    %2 = vector.extract_strided_slice %0 {offsets = [0, 0], sizes = [32, 1], strides = [1, 1]} : vector<32x3xf32> to vector<32x1xf32>
    %3 = vector.extract_strided_slice %1 {offsets = [0, 0], sizes = [1, 64], strides = [1, 1]} : vector<3x64xf32> to vector<1x64xf32>
    %4 = vector.broadcast %2 : vector<32x1xf32> to vector<32x64xf32>
    %5 = vector.broadcast %3 : vector<1x64xf32> to vector<32x64xf32>
    %6 = arith.mulf %4, %5 : vector<32x64xf32>
    %7 = vector.extract_strided_slice %0 {offsets = [0, 1], sizes = [32, 1], strides = [1, 1]} : vector<32x3xf32> to vector<32x1xf32>
    %8 = vector.extract_strided_slice %1 {offsets = [1, 0], sizes = [1, 64], strides = [1, 1]} : vector<3x64xf32> to vector<1x64xf32>
    %9 = vector.broadcast %7 : vector<32x1xf32> to vector<32x64xf32>
    %10 = vector.broadcast %8 : vector<1x64xf32> to vector<32x64xf32>
    %11 = arith.mulf %9, %10 : vector<32x64xf32>
    %12 = arith.addf %6, %11 : vector<32x64xf32>
    %13 = vector.extract_strided_slice %0 {offsets = [0, 2], sizes = [32, 1], strides = [1, 1]} : vector<32x3xf32> to vector<32x1xf32>
    %14 = vector.extract_strided_slice %1 {offsets = [2, 0], sizes = [1, 64], strides = [1, 1]} : vector<3x64xf32> to vector<1x64xf32>
    %15 = vector.broadcast %13 : vector<32x1xf32> to vector<32x64xf32>
    %16 = vector.broadcast %14 : vector<1x64xf32> to vector<32x64xf32>
    %17 = arith.mulf %15, %16 : vector<32x64xf32>
    %18 = arith.addf %12, %17 : vector<32x64xf32>
    %c2_i32 = arith.constant 2 : i32
    %19 = tpu.dynamic_rotate %18 by %c2_i32 dim 0 : vector<32x64xf32>, i32 -> vector<32x64xf32>
    %cst = arith.constant 0.666666686 : f32
    %20 = vector.broadcast %cst : f32 to vector<32x64xf32>
    %21 = arith.mulf %20, %19 : vector<32x64xf32>
    %cst_3 = arith.constant 0.333333343 : f32
    %22 = vector.broadcast %cst_3 : f32 to vector<32x64xf32>
    %23 = arith.mulf %22, %18 : vector<32x64xf32>
    %24 = arith.addf %21, %23 : vector<32x64xf32>
    %c0_4 = arith.constant 0 : index
    %c0_5 = arith.constant 0 : index
    %25 = vector.load %arg2[%c0_4, %c0_5] : memref<1x64xf32, #tpu.memory_space<vmem>>, vector<1x64xf32>
    %26 = vector.broadcast %25 : vector<1x64xf32> to vector<32x64xf32>
    %27 = arith.addf %24, %26 : vector<32x64xf32>
    %cst_6 = arith.constant 0.000000e+00 : f32
    %28 = vector.broadcast %cst_6 : f32 to vector<32x64xf32>
    %29 = arith.maximumf %27, %28 : vector<32x64xf32>
    %c0_7 = arith.constant 0 : index
    %c0_8 = arith.constant 0 : index
    %30 = vector.load %arg3[%c0_7, %c0_8] : memref<64x64xf32, #tpu.memory_space<vmem>>, vector<64x64xf32>
    %cst_9 = arith.constant dense<0.000000e+00> : vector<32x64xf32>
    %31 = tpu.matmul %29, %30, %cst_9 {dimension_numbers = #tpu.dot_dimension_numbers<[1], [0], [0], [1], [0, 0, 1, 1], [], []>} : vector<32x64xf32>, vector<64x64xf32>, vector<32x64xf32> -> vector<32x64xf32>
    %c2_i32_10 = arith.constant 2 : i32
    %32 = tpu.dynamic_rotate %31 by %c2_i32_10 dim 0 : vector<32x64xf32>, i32 -> vector<32x64xf32>
    %cst_11 = arith.constant 0.666666686 : f32
    %33 = vector.broadcast %cst_11 : f32 to vector<32x64xf32>
    %34 = arith.mulf %33, %32 : vector<32x64xf32>
    %cst_12 = arith.constant 0.333333343 : f32
    %35 = vector.broadcast %cst_12 : f32 to vector<32x64xf32>
    %36 = arith.mulf %35, %31 : vector<32x64xf32>
    %37 = arith.addf %34, %36 : vector<32x64xf32>
    %c0_13 = arith.constant 0 : index
    %c0_14 = arith.constant 0 : index
    %38 = vector.load %arg4[%c0_13, %c0_14] : memref<1x64xf32, #tpu.memory_space<vmem>>, vector<1x64xf32>
    %39 = vector.broadcast %38 : vector<1x64xf32> to vector<32x64xf32>
    %40 = arith.addf %37, %39 : vector<32x64xf32>
    %cst_15 = arith.constant 0.000000e+00 : f32
    %41 = vector.broadcast %cst_15 : f32 to vector<32x64xf32>
    %42 = arith.maximumf %40, %41 : vector<32x64xf32>
    %c0_16 = arith.constant 0 : index
    %c0_17 = arith.constant 0 : index
    %43 = vector.load %arg5[%c0_16, %c0_17] : memref<64x128xf32, #tpu.memory_space<vmem>>, vector<64x128xf32>
    %cst_18 = arith.constant dense<0.000000e+00> : vector<32x128xf32>
    %44 = tpu.matmul %42, %43, %cst_18 {dimension_numbers = #tpu.dot_dimension_numbers<[1], [0], [0], [1], [0, 0, 1, 1], [], []>} : vector<32x64xf32>, vector<64x128xf32>, vector<32x128xf32> -> vector<32x128xf32>
    %c0_19 = arith.constant 0 : index
    %c0_20 = arith.constant 0 : index
    %45 = vector.load %arg6[%c0_19, %c0_20] : memref<1x128xf32, #tpu.memory_space<vmem>>, vector<1x128xf32>
    %46 = vector.broadcast %45 : vector<1x128xf32> to vector<32x128xf32>
    %47 = arith.addf %44, %46 : vector<32x128xf32>
    %c0_21 = arith.constant 0 : index
    %c0_22 = arith.constant 0 : index
    %48 = vector.load %arg7[%c0_21, %c0_22] : memref<32x128xf32, #tpu.memory_space<vmem>>, vector<32x128xf32>
    tpu.vector_store %arg7[%c0_21, %c0_22], %47 {strides = array<i32>} : memref<32x128xf32, #tpu.memory_space<vmem>>, vector<32x128xf32>,
    return
  }
}

</mosaic_0001>

<llo_original>
// kernel: gnn_force_field_forward.1
$region0: #{gnn_force_field_forward.1}
  #allocation0 [shape = 'u32[]', space=smem, size = 0x4, offset = 0x4, fixed_abs, tag = 'smem constant byte address 0x4 - core index']
  #allocation1 [shape = 'u32[72,128]{1,0:T(1,128)}', space=vmem, size = 0x9000, scoped, tag = 'internal scratch']
  %s0 = inlined_call_operand.vmem [shape: f32[32,3], index: 0, kind: input, shape index: {}]
  %s1 = inlined_call_operand.vmem [shape: f32[3,64], index: 1, kind: input, shape index: {}]
  %s2 = inlined_call_operand.vmem [shape: f32[1,64], index: 2, kind: input, shape index: {}]
  %s3 = inlined_call_operand.vmem [shape: f32[64,64], index: 3, kind: input, shape index: {}]
  %s4 = inlined_call_operand.vmem [shape: f32[1,64], index: 4, kind: input, shape index: {}]
  %s5 = inlined_call_operand.vmem [shape: f32[64,128], index: 5, kind: input, shape index: {}]
  %s6 = inlined_call_operand.vmem [shape: f32[1,128], index: 6, kind: input, shape index: {}]
  %s7 = inlined_call_operand.vmem [shape: f32[32,128], index: 7, kind: output, shape index: {}]
  %s8 = sld [smem:[#allocation0]]
  $region38: #{gnn_force_field_forward.1} parent=0
    _
  %s10 = ssub.s32 1, %s8
  %s11 = scalar_select 0, %s10, %s8
  // Predicated region
  $region2: #{gnn_force_field_forward.1} parent=0 // pred_check
    _
  $region3: #{gnn_force_field_forward.1} parent=0 // pred_check_branch
    %13 = sbr.rel (0) target = $region5
  $region4: #{gnn_force_field_forward.1} parent=0 // pred_region
    _
  $region5: #{gnn_force_field_forward.1} parent=0 // pred_fallthru
    _
  // Predicated region
  $region6: #{gnn_force_field_forward.1} parent=0 // pred_check
    _
  $region7: #{gnn_force_field_forward.1} parent=0 // pred_check_branch
    %15 = sbr.rel (0) target = $region9
  $region8: #{gnn_force_field_forward.1} parent=0 // pred_region
    _
  $region9: #{gnn_force_field_forward.1} parent=0 // pred_fallthru
    _
  // Predicated region
  $region10: #{gnn_force_field_forward.1} parent=0 // pred_check
    _
  $region11: #{gnn_force_field_forward.1} parent=0 // pred_check_branch
    %17 = sbr.rel (0) target = $region13
  $region12: #{gnn_force_field_forward.1} parent=0 // pred_region
    _
  $region13: #{gnn_force_field_forward.1} parent=0 // pred_fallthru
    _
  // Predicated region
  $region14: #{gnn_force_field_forward.1} parent=0 // pred_check
    _
  $region15: #{gnn_force_field_forward.1} parent=0 // pred_check_branch
    %19 = sbr.rel (0) target = $region17
  $region16: #{gnn_force_field_forward.1} parent=0 // pred_region
    _
  $region17: #{gnn_force_field_forward.1} parent=0 // pred_fallthru
    _
  // Predicated region
  $region18: #{gnn_force_field_forward.1} parent=0 // pred_check
    _
  $region19: #{gnn_force_field_forward.1} parent=0 // pred_check_branch
    %21 = sbr.rel (0) target = $region21
  $region20: #{gnn_force_field_forward.1} parent=0 // pred_region
    _
  $region21: #{gnn_force_field_forward.1} parent=0 // pred_fallthru
    _
  // Predicated region
  $region22: #{gnn_force_field_forward.1} parent=0 // pred_check
    _
  $region23: #{gnn_force_field_forward.1} parent=0 // pred_check_branch
    %23 = sbr.rel (0) target = $region25
  $region24: #{gnn_force_field_forward.1} parent=0 // pred_region
    _
  $region25: #{gnn_force_field_forward.1} parent=0 // pred_fallthru
    _
  // Predicated region
  $region26: #{gnn_force_field_forward.1} parent=0 // pred_check
    _
  $region27: #{gnn_force_field_forward.1} parent=0 // pred_check_branch
    %25 = sbr.rel (0) target = $region29
  $region28: #{gnn_force_field_forward.1} parent=0 // pred_region
    _
  $region29: #{gnn_force_field_forward.1} parent=0 // pred_fallthru
    _
  %v26 = vld [vmem:[%s0] sm:$0xff]
  %v27 = vld [vmem:[%s0 + $0x8] sm:$0xff]
  %v28 = vld [vmem:[%s0 + $0x10] sm:$0xff]
  %v29 = vld [vmem:[%s0 + $0x18] sm:$0xff]
  %v30 = vld [vmem:[%s1] sm:$0x7]
  %32 = vset.pattern.permute.xlu0 0
  %33 = vperm.xlu0 %32, %v26
  %v34 = vpop.permute.xlu0 %33
  %37 = vset.pattern.permute.xlu0 0
  %38 = vperm.xlu0 %37, %v27
  %v39 = vpop.permute.xlu0 %38
  %42 = vset.pattern.permute.xlu0 0
  %43 = vperm.xlu0 %42, %v28
  %v44 = vpop.permute.xlu0 %43
  %47 = vset.pattern.permute.xlu0 0
  %48 = vperm.xlu0 %47, %v29
  %v49 = vpop.permute.xlu0 %48
  %v51 = vperm.slane %v30, 0
  %v52 = vmul.f32 %v34, %v51
  %v53 = vmul.f32 %v39, %v51
  %v54 = vmul.f32 %v44, %v51
  %v55 = vmul.f32 %v49, %v51
  %56 = vset.pattern.permute.xlu0 1
  %57 = vperm.xlu0 %56, %v26
  %v58 = vpop.permute.xlu0 %57
  %60 = vset.pattern.permute.xlu0 1
  %61 = vperm.xlu0 %60, %v27
  %v62 = vpop.permute.xlu0 %61
  %64 = vset.pattern.permute.xlu0 1
  %65 = vperm.xlu0 %64, %v28
  %v66 = vpop.permute.xlu0 %65
  %68 = vset.pattern.permute.xlu0 1
  %69 = vperm.xlu0 %68, %v29
  %v70 = vpop.permute.xlu0 %69
  %v72 = vperm.slane %v30, 1
  %v73 = vmul.f32 %v58, %v72
  %v74 = vmul.f32 %v62, %v72
  %v75 = vmul.f32 %v66, %v72
  %v76 = vmul.f32 %v70, %v72
  %v77 = vadd.f32 %v52, %v73
  %v78 = vadd.f32 %v53, %v74
  %v79 = vadd.f32 %v54, %v75
  %v80 = vadd.f32 %v55, %v76
  %81 = vset.pattern.permute.xlu0 2
  %82 = vperm.xlu0 %81, %v26
  %v83 = vpop.permute.xlu0 %82
  %85 = vset.pattern.permute.xlu0 2
  %86 = vperm.xlu0 %85, %v27
  %v87 = vpop.permute.xlu0 %86
  %89 = vset.pattern.permute.xlu0 2
  %90 = vperm.xlu0 %89, %v28
  %v91 = vpop.permute.xlu0 %90
  %93 = vset.pattern.permute.xlu0 2
  %94 = vperm.xlu0 %93, %v29
  %v95 = vpop.permute.xlu0 %94
  %v97 = vperm.slane %v30, 2
  %v98 = vmul.f32 %v83, %v97
  %v99 = vmul.f32 %v87, %v97
  %v100 = vmul.f32 %v91, %v97
  %v101 = vmul.f32 %v95, %v97
  %v102 = vadd.f32 %v77, %v98
  %v103 = vadd.f32 %v78, %v99
  %v104 = vadd.f32 %v79, %v100
  %v105 = vadd.f32 %v80, %v101
  %v106 = vrot.slane %v102, 6
  %v107 = vrot.slane %v103, 6
  %v108 = vrot.slane %v104, 6
  %v109 = vrot.slane %v105, 6
  %v110 = vlaneseq
  %v111 = vshrl.u32 %v110, 7
  %vm112 = vcmp.lt.s32.totalorder %v111, 2
  %v113 = vsel %vm112, %v108, %v109
  %v114 = vsel %vm112, %v107, %v108
  %v115 = vsel %vm112, %v106, %v107
  %v116 = vsel %vm112, %v109, %v106
  %v117 = vmul.f32 %v116, 0.6666667
  %v118 = vmul.f32 %v115, 0.6666667
  %v119 = vmul.f32 %v114, 0.6666667
  %v120 = vmul.f32 %v113, 0.6666667
  %v121 = vmul.f32 %v102, 0.33333334
  %v122 = vmul.f32 %v103, 0.33333334
  %v123 = vmul.f32 %v104, 0.33333334
  %v124 = vmul.f32 %v105, 0.33333334
  %v125 = vadd.f32 %v117, %v121
  %v126 = vadd.f32 %v118, %v122
  %v127 = vadd.f32 %v119, %v123
  %v128 = vadd.f32 %v120, %v124
  %v129 = vld [vmem:[%s2] sm:$0x1]
  %v131 = vperm.slane %v129, 0
  %v133 = vadd.f32 %v125, %v131
  %v134 = vadd.f32 %v126, %v131
  %v135 = vadd.f32 %v127, %v131
  %v136 = vadd.f32 %v128, %v131
  %v137 = vmax.f32 %v133, 0.0
  %v138 = vmax.f32 %v134, 0.0
  %v139 = vmax.f32 %v135, 0.0
  %v140 = vmax.f32 %v136, 0.0
  %v141 = vld [vmem:[%s3] sm:$0xff]
  %v142 = vld [vmem:[%s3 + $0x8] sm:$0xff]
  %v143 = vld [vmem:[%s3 + $0x10] sm:$0xff]
  %v144 = vld [vmem:[%s3 + $0x18] sm:$0xff]
  %v145 = vld [vmem:[%s3 + $0x20] sm:$0xff]
  %v146 = vld [vmem:[%s3 + $0x28] sm:$0xff]
  %v147 = vld [vmem:[%s3 + $0x30] sm:$0xff]
  %v148 = vld [vmem:[%s3 + $0x38] sm:$0xff]
  %vm149 = vcmask 523264
  %v151 = vsel %vm149, %v137, 0
  %v154 = vsel %vm149, %v138, 0
  %v157 = vsel %vm149, %v139, 0
  %v160 = vsel %vm149, %v140, 0
  %162 = vmatpush.msra.mxu0 0.0
  %163 = vmatpush.msra.mxu0 0.0
  %164 = vmatpush.msra.mxu0 0.0
  %165 = vmatpush.msra.mxu0 0.0
  %166 = vmatpush.msra.mxu0 0.0
  %167 = vmatpush.msra.mxu0 0.0
  %168 = vmatpush.msra.mxu0 0.0
  %169 = vmatpush.msra.mxu0 0.0
  %170 = vmatpush.msra.mxu0 %v148
  %171 = vmatpush.msra.mxu0 %v147
  %172 = vmatpush.msra.mxu0 %v146
  %173 = vmatpush.msra.mxu0 %v145
  %174 = vmatpush.msra.mxu0 %v144
  %175 = vmatpush.msra.mxu0 %v143
  %176 = vmatpush.msra.mxu0 %v142
  %177 = vmatpush.msra.mxu0 %v141
  %178 = vmatmul.f32.gmra.mxu0 %v151
  %v179 = vpop.f32.mrf.mxu0
  %v180 = vadd.f32 0.0, %v179
  %181 = vmatmul.f32.gmra.mxu0 %v154
  %v182 = vpop.f32.mrf.mxu0
  %v183 = vadd.f32 0.0, %v182
  %184 = vmatmul.f32.gmra.mxu0 %v157
  %v185 = vpop.f32.mrf.mxu0
  %v186 = vadd.f32 0.0, %v185
  %187 = vmatmul.f32.gmra.mxu0 %v160
  %v188 = vpop.f32.mrf.mxu0
  %v189 = vadd.f32 0.0, %v188
  %190 = vdwg.mxu0
  %v191 = vrot.slane %v180, 6
  %v192 = vrot.slane %v183, 6
  %v193 = vrot.slane %v186, 6
  %v194 = vrot.slane %v189, 6
  %v195 = vsel %vm112, %v193, %v194
  %v196 = vsel %vm112, %v192, %v193
  %v197 = vsel %vm112, %v191, %v192
  %v198 = vsel %vm112, %v194, %v191
  %v199 = vmul.f32 %v198, 0.6666667
  %v200 = vmul.f32 %v197, 0.6666667
  %v201 = vmul.f32 %v196, 0.6666667
  %v202 = vmul.f32 %v195, 0.6666667
  %v203 = vmul.f32 %v180, 0.33333334
  %v204 = vmul.f32 %v183, 0.33333334
  %v205 = vmul.f32 %v186, 0.33333334
  %v206 = vmul.f32 %v189, 0.33333334
  %v207 = vadd.f32 %v199, %v203
  %v208 = vadd.f32 %v200, %v204
  %v209 = vadd.f32 %v201, %v205
  %v210 = vadd.f32 %v202, %v206
  %v211 = vld [vmem:[%s4] sm:$0x1]
  %v213 = vperm.slane %v211, 0
  %v215 = vadd.f32 %v207, %v213
  %v216 = vadd.f32 %v208, %v213
  %v217 = vadd.f32 %v209, %v213
  %v218 = vadd.f32 %v210, %v213
  %v219 = vmax.f32 %v215, 0.0
  %v220 = vmax.f32 %v216, 0.0
  %v221 = vmax.f32 %v217, 0.0
  %v222 = vmax.f32 %v218, 0.0
  %v223 = vld [vmem:[%s5] sm:$0xff]
  %v224 = vld [vmem:[%s5 + $0x8] sm:$0xff]
  %v225 = vld [vmem:[%s5 + $0x10] sm:$0xff]
  %v226 = vld [vmem:[%s5 + $0x18] sm:$0xff]
  %v227 = vld [vmem:[%s5 + $0x20] sm:$0xff]
  %v228 = vld [vmem:[%s5 + $0x28] sm:$0xff]
  %v229 = vld [vmem:[%s5 + $0x30] sm:$0xff]
  %v230 = vld [vmem:[%s5 + $0x38] sm:$0xff]
  %v231 = vld [vmem:[%s6] sm:$0x1]
  %v233 = vperm.slane %v231, 0
  %v236 = vsel %vm149, %v219, 0
  %v239 = vsel %vm149, %v220, 0
  %v242 = vsel %vm149, %v221, 0
  %v245 = vsel %vm149, %v222, 0
  %247 = vmatpush.msra.mxu0 0.0
  %248 = vmatpush.msra.mxu0 0.0
  %249 = vmatpush.msra.mxu0 0.0
  %250 = vmatpush.msra.mxu0 0.0
  %251 = vmatpush.msra.mxu0 0.0
  %252 = vmatpush.msra.mxu0 0.0
  %253 = vmatpush.msra.mxu0 0.0
  %254 = vmatpush.msra.mxu0 0.0
  %255 = vmatpush.msra.mxu0 %v230
  %256 = vmatpush.msra.mxu0 %v229
  %257 = vmatpush.msra.mxu0 %v228
  %258 = vmatpush.msra.mxu0 %v227
  %259 = vmatpush.msra.mxu0 %v226
  %260 = vmatpush.msra.mxu0 %v225
  %261 = vmatpush.msra.mxu0 %v224
  %262 = vmatpush.msra.mxu0 %v223
  %263 = vmatmul.f32.gmra.mxu0 %v236
  %v264 = vpop.f32.mrf.mxu0
  %v265 = vadd.f32 %v233, %v264
  %266 = vmatmul.f32.gmra.mxu0 %v239
  %v267 = vpop.f32.mrf.mxu0
  %v268 = vadd.f32 %v233, %v267
  %269 = vmatmul.f32.gmra.mxu0 %v242
  %v270 = vpop.f32.mrf.mxu0
  %v271 = vadd.f32 %v233, %v270
  %272 = vmatmul.f32.gmra.mxu0 %v245
  %v273 = vpop.f32.mrf.mxu0
  %v274 = vadd.f32 %v233, %v273
  %275 = vdwg.mxu0
  %276 = vst [vmem:[%s7] sm:$0xff] %v265
  %277 = vst [vmem:[%s7 + $0x8] sm:$0xff] %v268
  %278 = vst [vmem:[%s7 + $0x10] sm:$0xff] %v271
  %279 = vst [vmem:[%s7 + $0x18] sm:$0xff] %v274
  // Predicated region
  $region30: #{gnn_force_field_forward.1} parent=0 // pred_check
    _
  $region31: #{gnn_force_field_forward.1} parent=0 // pred_check_branch
    %281 = sbr.rel (0) target = $region33
  $region32: #{gnn_force_field_forward.1} parent=0 // pred_region
    _
  $region33: #{gnn_force_field_forward.1} parent=0 // pred_fallthru
    _
  // Predicated region
  $region34: #{gnn_force_field_forward.1} parent=0 // pred_check
    _
  $region35: #{gnn_force_field_forward.1} parent=0 // pred_check_branch
    %283 = sbr.rel (0) target = $region37
  $region36: #{gnn_force_field_forward.1} parent=0 // pred_region
    _
  $region37: #{gnn_force_field_forward.1} parent=0 // pred_fallthru
    _

</llo_original>
